<compile_context>
chip_gen: v7x
topology: tpu7x:2x2x1
jax: 0.10.0
libtpu: 0.0.40
codegen_flags: <defaults>
</compile_context>

<pallas_src>
import jax
import jax.numpy as jnp
from jax import lax
from jax.experimental import pallas as pl
from jax.experimental.pallas import tpu as pltpu


def decoder_rnn_kernel(x_ref,      # (T, E)   gathered token embeddings (param dtype)
                       h0_ref,     # (1, H)   initial hidden, f32
                       wih_ref,    # (E, 3H)  GRU input weights  (gate order r|z|n)
                       bih_ref,    # (1, 3H)  f32
                       whh_ref,    # (H, 3H)  GRU hidden weights (gate order r|z|n)
                       bhh_ref,    # (1, 3H)  f32
                       wout_ref,   # (H, Vp)  output projection (lane padded)
                       bout_ref,   # (1, Vp)  f32, -1e30 in pad lanes
                       logp_ref,   # out (T, Vp) log-softmax slab, f32
                       hout_ref,   # out (1, H)  final hidden, f32
                       gx_scr,     # scratch (T, 3H) f32: hoisted x-path gate preacts
                       hs_scr):    # scratch (T, H)  f32: per-step hidden states
    T, H = hs_scr.shape

    # ---- hoisted, batched non-recurrent path: relu(emb) @ Wih + bih --------
    x = jnp.maximum(x_ref[...], 0.0).astype(wih_ref.dtype)            # ReLU
    gx_scr[...] = jnp.dot(x, wih_ref[...],
                          preferred_element_type=jnp.float32) + bih_ref[...]

    # ---- serial GRU recurrence: only h @ Whh stays on the critical path ----
    def step(t, h):
        gh = jnp.dot(h.astype(whh_ref.dtype), whh_ref[...],
                     preferred_element_type=jnp.float32) + bhh_ref[...]   # (1, 3H)
        gx = gx_scr[pl.ds(t, 1), :]                                       # (1, 3H)
        # PyTorch GRU: r, z, n ; n = tanh(gi_n + bih_n + r*(gh_n + bhh_n))
        r = jax.nn.sigmoid(gx[:, 0:H] + gh[:, 0:H])
        z = jax.nn.sigmoid(gx[:, H:2 * H] + gh[:, H:2 * H])
        n = jnp.tanh(gx[:, 2 * H:3 * H] + r * gh[:, 2 * H:3 * H])
        h_new = (1.0 - z) * n + z * h
        hs_scr[pl.ds(t, 1), :] = h_new
        return h_new

    h_final = lax.fori_loop(0, T, step, h0_ref[...], unroll=True)
    hout_ref[...] = h_final

    # ---- batched output projection + numerically stable log-softmax --------
    logits = jnp.dot(hs_scr[...].astype(wout_ref.dtype), wout_ref[...],
                     preferred_element_type=jnp.float32) + bout_ref[...]   # (T, Vp)
    m = jnp.max(logits, axis=-1, keepdims=True)
    s = logits - m
    lse = jnp.log(jnp.sum(jnp.exp(s), axis=-1, keepdims=True))
    logp_ref[...] = s - lse


def decoder_rnn_decode(tokens, hidden, emb, wih_t, whh_t, bih, bhh, wout_t, bout,
                       *, param_dtype=jnp.bfloat16):
    """Run T GRU-decoder steps in one grid-less pallas_call.

    tokens : (T,) int      token ids fed at each step
    hidden : (1, 1, H)     initial hidden (PyTorch initHidden() shape)
    emb    : (V, E)        embedding table
    wih_t  : (E, 3H)       pre-transposed GRU input weights  (gate order r|z|n)
    whh_t  : (H, 3H)       pre-transposed GRU hidden weights (gate order r|z|n)
    bih,bhh: (1, 3H)
    wout_t : (H, V), bout : (1, V)
    Returns (logp (T, V), hidden (1, 1, H)). T=1 matches DecoderRNN.forward.
    """
    tokens = tokens.astype(jnp.int32)
    T = int(tokens.shape[0])
    V, E = emb.shape
    H = hidden.shape[-1]
    Vp = ((V + 127) // 128) * 128                  # lane-dense output width

    # Embedding gather stays in the wrapper so the (V,E) table never occupies
    # VMEM (v7x 64 MiB safety at realistic vocab); out-of-range ids are clamped.
    x_emb = jnp.take(emb, tokens, axis=0).astype(param_dtype)         # (T, E)

    # Lane-padded output projection; f32 pad bias of -1e30 makes the padded
    # logits irrelevant for the log-softmax (do NOT cast this bias to bf16).
    if Vp > V:
        wout_p = jnp.concatenate(
            [wout_t, jnp.zeros((H, Vp - V), wout_t.dtype)], axis=1)
        bout_p = jnp.concatenate(
            [bout.astype(jnp.float32),
             jnp.full((1, Vp - V), -1e30, jnp.float32)], axis=1)
    else:
        wout_p, bout_p = wout_t, bout.astype(jnp.float32)

    wih = wih_t.astype(param_dtype)
    whh = whh_t.astype(param_dtype)
    wout_p = wout_p.astype(param_dtype)
    bih_f = bih.astype(jnp.float32)
    bhh_f = bhh.astype(jnp.float32)
    h0 = hidden.reshape(1, H).astype(jnp.float32)

    vmem = pl.BlockSpec(memory_space=pltpu.MemorySpace.VMEM)
    itemsize = jnp.dtype(param_dtype).itemsize
    cost = pl.CostEstimate(
        flops=2 * T * (E * 3 * H + H * 3 * H + H * Vp),
        transcendentals=T * (3 * H + Vp),
        bytes_accessed=(itemsize * (T * E + E * 3 * H + H * 3 * H + H * Vp)
                        + 4 * (2 * 3 * H + Vp + H)
                        + 4 * (T * Vp + H)),
    )

    logp_pad, h_final = pl.pallas_call(
        decoder_rnn_kernel,
        out_shape=(jax.ShapeDtypeStruct((T, Vp), jnp.float32),
                   jax.ShapeDtypeStruct((1, H), jnp.float32)),
        in_specs=[vmem] * 8,
        out_specs=(vmem, vmem),
        scratch_shapes=[pltpu.VMEM((T, 3 * H), jnp.float32),   # hoisted x-path gates
                        pltpu.VMEM((T, H), jnp.float32)],      # per-step hidden states
        cost_estimate=cost,
    )(x_emb, h0, wih, bih_f, whh, bhh_f, wout_p, bout_p)

    return logp_pad[:, :V], h_final.reshape(1, 1, H)


def _reference_decode(tokens, emb, hidden, wih_t, whh_t, bih, bhh, wout_t, bout):
    """Pure-JAX f32 per-step loop matching PyTorch DecoderRNN.forward semantics."""
    H = hidden.shape[-1]
    h = hidden.reshape(1, H)
    logps = []
    for tok in tokens:
        x = jnp.maximum(emb[tok][None, :], 0.0)
        gi = x @ wih_t + bih
        gh = h @ whh_t + bhh
        r = jax.nn.sigmoid(gi[:, 0:H] + gh[:, 0:H])
        z = jax.nn.sigmoid(gi[:, H:2 * H] + gh[:, H:2 * H])
        n = jnp.tanh(gi[:, 2 * H:] + r * gh[:, 2 * H:])
        h = (1.0 - z) * n + z * h
        logits = h @ wout_t + bout
        logps.append(jax.nn.log_softmax(logits, axis=1))
    return jnp.concatenate(logps, axis=0), h.reshape(1, 1, H)


if __name__ == "__main__":
    H = 32          # hidden_size
    V = 64          # output_size (vocab)
    E = H           # embedding_dim (nn.Embedding(output_size, hidden_size))
    T = 8           # decode steps folded into one kernel launch

    key = jax.random.PRNGKey(0)
    ks = jax.random.split(key, 8)
    emb    = jax.random.normal(ks[0], (V, E), jnp.float32) * 0.5
    wih_t  = jax.random.normal(ks[1], (E, 3 * H), jnp.float32) * 0.1
    whh_t  = jax.random.normal(ks[2], (H, 3 * H), jnp.float32) * 0.1
    bih    = jax.random.normal(ks[3], (1, 3 * H), jnp.float32) * 0.1
    bhh    = jax.random.normal(ks[4], (1, 3 * H), jnp.float32) * 0.1
    wout_t = jax.random.normal(ks[5], (H, V), jnp.float32) * 0.1
    bout   = jax.random.normal(ks[6], (1, V), jnp.float32) * 0.1
    tokens = jax.random.randint(ks[7], (T,), 0, V, dtype=jnp.int32)

    hidden0 = jnp.zeros((1, 1, H), jnp.float32)       # initHidden()

    # --- f32 kernel, single step: exactly the PyTorch module's forward() ---
    logp1, h1 = decoder_rnn_decode(tokens[:1], hidden0, emb, wih_t, whh_t,
                                   bih, bhh, wout_t, bout,
                                   param_dtype=jnp.float32)
    jax.block_until_ready((logp1, h1))
    ref_logp1, ref_h1 = _reference_decode(tokens[:1], emb, hidden0, wih_t, whh_t,
                                          bih, bhh, wout_t, bout)
    assert logp1.shape == (1, V) and h1.shape == (1, 1, H)
    assert jnp.allclose(logp1, ref_logp1, atol=1e-4, rtol=1e-4)
    assert jnp.allclose(h1, ref_h1, atol=1e-4, rtol=1e-4)

    # --- f32 kernel, T decode steps inside ONE pallas_call ---
    logp, h_final = decoder_rnn_decode(tokens, hidden0, emb, wih_t, whh_t,
                                       bih, bhh, wout_t, bout,
                                       param_dtype=jnp.float32)
    jax.block_until_ready((logp, h_final))
    ref_logp, ref_h = _reference_decode(tokens, emb, hidden0, wih_t, whh_t,
                                        bih, bhh, wout_t, bout)
    assert logp.shape == (T, V) and h_final.shape == (1, 1, H)
    assert jnp.allclose(logp, ref_logp, atol=1e-4, rtol=1e-4)
    assert jnp.allclose(h_final, ref_h, atol=1e-4, rtol=1e-4)

    # --- bf16-weight variant (MXU-friendly on v6e/v7x), looser tolerance ---
    logp_bf, h_bf = decoder_rnn_decode(tokens, hidden0, emb, wih_t, whh_t,
                                       bih, bhh, wout_t, bout,
                                       param_dtype=jnp.bfloat16)
    jax.block_until_ready((logp_bf, h_bf))
    assert jnp.allclose(logp_bf, ref_logp, atol=3e-2, rtol=3e-2)
    assert jnp.allclose(h_bf, ref_h, atol=3e-2, rtol=3e-2)

    print("KERNEL_OK")
</pallas_src>

<mosaic_0001>
module attributes {stable_mosaic.version = 11 : i64} {
  func.func @decoder_rnn_kernel(%arg0: memref<1x32xf32, #tpu.memory_space<vmem>>, %arg1: memref<1x32xf32, #tpu.memory_space<vmem>>, %arg2: memref<32x96xf32, #tpu.memory_space<vmem>>, %arg3: memref<1x96xf32, #tpu.memory_space<vmem>>, %arg4: memref<32x96xf32, #tpu.memory_space<vmem>>, %arg5: memref<1x96xf32, #tpu.memory_space<vmem>>, %arg6: memref<32x128xf32, #tpu.memory_space<vmem>>, %arg7: memref<1x128xf32, #tpu.memory_space<vmem>>, %arg8: memref<1x128xf32, #tpu.memory_space<vmem>>, %arg9: memref<1x32xf32, #tpu.memory_space<vmem>>, %arg10: memref<1x96xf32, #tpu.memory_space<vmem>>, %arg11: memref<1x32xf32, #tpu.memory_space<vmem>>) attributes {dimension_semantics = [], scalar_prefetch = 0 : i64, scratch_operands = 2 : i64, tpu.core_type = #tpu.core_type<tc>} {
    %c0 = arith.constant 0 : index
    %c0_0 = arith.constant 0 : index
    %0 = vector.load %arg0[%c0, %c0_0] : memref<1x32xf32, #tpu.memory_space<vmem>>, vector<1x32xf32>
    %cst = arith.constant 0.000000e+00 : f32
    %1 = vector.broadcast %cst : f32 to vector<1x32xf32>
    %2 = arith.maximumf %0, %1 : vector<1x32xf32>
    %c0_1 = arith.constant 0 : index
    %c0_2 = arith.constant 0 : index
    %3 = vector.load %arg2[%c0_1, %c0_2] : memref<32x96xf32, #tpu.memory_space<vmem>>, vector<32x96xf32>
    %cst_3 = arith.constant dense<0.000000e+00> : vector<1x96xf32>
    %4 = tpu.matmul %2, %3, %cst_3 {dimension_numbers = #tpu.dot_dimension_numbers<[1], [0], [0], [1], [0, 0, 1, 1], [], []>} : vector<1x32xf32>, vector<32x96xf32>, vector<1x96xf32> -> vector<1x96xf32>
    %c0_4 = arith.constant 0 : index
    %c0_5 = arith.constant 0 : index
    %5 = vector.load %arg3[%c0_4, %c0_5] : memref<1x96xf32, #tpu.memory_space<vmem>>, vector<1x96xf32>
    %6 = arith.addf %4, %5 : vector<1x96xf32>
    %c0_6 = arith.constant 0 : index
    %c0_7 = arith.constant 0 : index
    %7 = vector.load %arg10[%c0_6, %c0_7] : memref<1x96xf32, #tpu.memory_space<vmem>>, vector<1x96xf32>
    tpu.vector_store %arg10[%c0_6, %c0_7], %6 {strides = array<i32>} : memref<1x96xf32, #tpu.memory_space<vmem>>, vector<1x96xf32>,
    %c0_8 = arith.constant 0 : index
    %c0_9 = arith.constant 0 : index
    %8 = vector.load %arg1[%c0_8, %c0_9] : memref<1x32xf32, #tpu.memory_space<vmem>>, vector<1x32xf32>
    %c0_i32 = arith.constant 0 : i32
    %c0_10 = arith.constant 0 : index
    %c0_11 = arith.constant 0 : index
    %9 = vector.load %arg4[%c0_10, %c0_11] : memref<32x96xf32, #tpu.memory_space<vmem>>, vector<32x96xf32>
    %cst_12 = arith.constant dense<0.000000e+00> : vector<1x96xf32>
    %10 = tpu.matmul %8, %9, %cst_12 {dimension_numbers = #tpu.dot_dimension_numbers<[1], [0], [0], [1], [0, 0, 1, 1], [], []>} : vector<1x32xf32>, vector<32x96xf32>, vector<1x96xf32> -> vector<1x96xf32>
    %c0_13 = arith.constant 0 : index
    %c0_14 = arith.constant 0 : index
    %11 = vector.load %arg5[%c0_13, %c0_14] : memref<1x96xf32, #tpu.memory_space<vmem>>, vector<1x96xf32>
    %12 = arith.addf %10, %11 : vector<1x96xf32>
    %13 = arith.index_cast %c0_i32 : i32 to index
    %c0_15 = arith.constant 0 : index
    %14 = vector.load %arg10[%13, %c0_15] : memref<1x96xf32, #tpu.memory_space<vmem>>, vector<1x96xf32>
    %15 = vector.extract_strided_slice %14 {offsets = [0, 0], sizes = [1, 32], strides = [1, 1]} : vector<1x96xf32> to vector<1x32xf32>
    %16 = vector.extract_strided_slice %12 {offsets = [0, 0], sizes = [1, 32], strides = [1, 1]} : vector<1x96xf32> to vector<1x32xf32>
    %17 = arith.addf %15, %16 : vector<1x32xf32>
    %18 = arith.negf %17 : vector<1x32xf32>
    %19 = math.exp %18 : vector<1x32xf32>
    %cst_16 = arith.constant 1.000000e+00 : f32
    %20 = vector.broadcast %cst_16 : f32 to vector<1x32xf32>
    %21 = arith.addf %20, %19 : vector<1x32xf32>
    %22 = arith.divf %20, %21 : vector<1x32xf32>
    %23 = vector.extract_strided_slice %14 {offsets = [0, 32], sizes = [1, 32], strides = [1, 1]} : vector<1x96xf32> to vector<1x32xf32>
    %24 = vector.extract_strided_slice %12 {offsets = [0, 32], sizes = [1, 32], strides = [1, 1]} : vector<1x96xf32> to vector<1x32xf32>
    %25 = arith.addf %23, %24 : vector<1x32xf32>
    %26 = arith.negf %25 : vector<1x32xf32>
    %27 = math.exp %26 : vector<1x32xf32>
    %cst_17 = arith.constant 1.000000e+00 : f32
    %28 = vector.broadcast %cst_17 : f32 to vector<1x32xf32>
    %29 = arith.addf %28, %27 : vector<1x32xf32>
    %30 = arith.divf %28, %29 : vector<1x32xf32>
    %31 = vector.extract_strided_slice %14 {offsets = [0, 64], sizes = [1, 32], strides = [1, 1]} : vector<1x96xf32> to vector<1x32xf32>
    %32 = vector.extract_strided_slice %12 {offsets = [0, 64], sizes = [1, 32], strides = [1, 1]} : vector<1x96xf32> to vector<1x32xf32>
    %33 = arith.mulf %22, %32 : vector<1x32xf32>
    %34 = arith.addf %31, %33 : vector<1x32xf32>
    %35 = math.tanh %34 : vector<1x32xf32>
    %cst_18 = arith.constant 1.000000e+00 : f32
    %36 = vector.broadcast %cst_18 : f32 to vector<1x32xf32>
    %37 = arith.subf %36, %30 : vector<1x32xf32>
    %38 = arith.mulf %37, %35 : vector<1x32xf32>
    %39 = arith.mulf %30, %8 : vector<1x32xf32>
    %40 = arith.addf %38, %39 : vector<1x32xf32>
    %41 = arith.index_cast %c0_i32 : i32 to index
    %c0_19 = arith.constant 0 : index
    %42 = vector.load %arg11[%41, %c0_19] : memref<1x32xf32, #tpu.memory_space<vmem>>, vector<1x32xf32>
    tpu.vector_store %arg11[%41, %c0_19], %40 {strides = array<i32>} : memref<1x32xf32, #tpu.memory_space<vmem>>, vector<1x32xf32>,
    %c1_i32 = arith.constant 1 : i32
    %c0_20 = arith.constant 0 : index
    %c0_21 = arith.constant 0 : index
    %43 = vector.load %arg9[%c0_20, %c0_21] : memref<1x32xf32, #tpu.memory_space<vmem>>, vector<1x32xf32>
    tpu.vector_store %arg9[%c0_20, %c0_21], %40 {strides = array<i32>} : memref<1x32xf32, #tpu.memory_space<vmem>>, vector<1x32xf32>,
    %c0_22 = arith.constant 0 : index
    %c0_23 = arith.constant 0 : index
    %44 = vector.load %arg11[%c0_22, %c0_23] : memref<1x32xf32, #tpu.memory_space<vmem>>, vector<1x32xf32>
    %c0_24 = arith.constant 0 : index
    %c0_25 = arith.constant 0 : index
    %45 = vector.load %arg6[%c0_24, %c0_25] : memref<32x128xf32, #tpu.memory_space<vmem>>, vector<32x128xf32>
    %cst_26 = arith.constant dense<0.000000e+00> : vector<1x128xf32>
    %46 = tpu.matmul %44, %45, %cst_26 {dimension_numbers = #tpu.dot_dimension_numbers<[1], [0], [0], [1], [0, 0, 1, 1], [], []>} : vector<1x32xf32>, vector<32x128xf32>, vector<1x128xf32> -> vector<1x128xf32>
    %c0_27 = arith.constant 0 : index
    %c0_28 = arith.constant 0 : index
    %47 = vector.load %arg7[%c0_27, %c0_28] : memref<1x128xf32, #tpu.memory_space<vmem>>, vector<1x128xf32>
    %48 = arith.addf %46, %47 : vector<1x128xf32>
    %cst_29 = arith.constant dense<0xFF800000> : vector<1xf32>
    %49 = vector.multi_reduction <maximumf>, %48, %cst_29 [1] : vector<1x128xf32> to vector<1xf32>
    %50 = vector.shape_cast %49 : vector<1xf32> to vector<1x1xf32>
    %51 = vector.broadcast %50 : vector<1x1xf32> to vector<1x128xf32>
    %52 = arith.subf %48, %51 : vector<1x128xf32>
    %53 = math.exp %52 : vector<1x128xf32>
    %cst_30 = arith.constant dense<0.000000e+00> : vector<1xf32>
    %54 = vector.multi_reduction <add>, %53, %cst_30 [1] : vector<1x128xf32> to vector<1xf32>
    %55 = vector.shape_cast %54 : vector<1xf32> to vector<1x1xf32>
    %56 = math.log %55 : vector<1x1xf32>
    %57 = vector.broadcast %56 : vector<1x1xf32> to vector<1x128xf32>
    %58 = arith.subf %52, %57 : vector<1x128xf32>
    %c0_31 = arith.constant 0 : index
    %c0_32 = arith.constant 0 : index
    %59 = vector.load %arg8[%c0_31, %c0_32] : memref<1x128xf32, #tpu.memory_space<vmem>>, vector<1x128xf32>
    tpu.vector_store %arg8[%c0_31, %c0_32], %58 {strides = array<i32>} : memref<1x128xf32, #tpu.memory_space<vmem>>, vector<1x128xf32>,
    return
  }
}

</mosaic_0001>

<llo_original>
// kernel: tpu_custom_call.1
$region0: #{tpu_custom_call.1}
  #allocation0 [shape = 'u32[]', space=smem, size = 0x4, offset = 0x4, fixed_abs, tag = 'smem constant byte address 0x4 - core index']
  #allocation1 [shape = 'u32[144,128]{1,0:T(1,128)}', space=vmem, size = 0x12000, scoped, tag = 'internal scratch']
  #allocation2 [shape = 'f32[1,96]{1,0:T(1,128)}', space=vmem, size = 0x200, scoped, tag = 'scratch operand']
  #allocation3 [shape = 'f32[1,32]{1,0:T(1,128)}', space=vmem, size = 0x200, scoped, tag = 'scratch operand']
  %s0 = inlined_call_operand.hbm [shape: f32[1,32], index: 0, kind: input, shape index: {}]
  %s1 = inlined_call_operand.vmem [shape: f32[1,32], index: 1, kind: input, shape index: {}]
  %s2 = inlined_call_operand.hbm [shape: f32[32,96], index: 2, kind: input, shape index: {}]
  %s3 = inlined_call_operand.vmem [shape: f32[1,96], index: 3, kind: input, shape index: {}]
  %s4 = inlined_call_operand.hbm [shape: f32[32,96], index: 4, kind: input, shape index: {}]
  %s5 = inlined_call_operand.vmem [shape: f32[1,96], index: 5, kind: input, shape index: {}]
  %s6 = inlined_call_operand.hbm [shape: f32[32,128], index: 6, kind: input, shape index: {}]
  %s7 = inlined_call_operand.vmem [shape: f32[1,128], index: 7, kind: input, shape index: {}]
  %s8 = inlined_call_operand.hbm [shape: f32[1,128], index: 8, kind: output, shape index: {0}]
  %s9 = inlined_call_operand.hbm [shape: f32[1,32], index: 9, kind: output, shape index: {1}]
  %10 = xla_tuple %s8, %s9
  %s11 = sld [smem:[#allocation0]]
  $region66: #{tpu_custom_call.1} parent=0
    _
  %s13 = ssub.s32 1, %s11
  %s14 = scalar_select 0, %s13, %s11
  $region1: #{tpu_custom_call.1} parent=0
    #allocation4 [shape = 'u8[512]{0}', space=vmem, size = 0x400, scoped, tag = 'input window, operand 0, single buffered']
    #allocation5 [shape = 's32[1]{0}', space=sflag, size = 0x4, scoped, tag = 'scoped memory for tpu_custom_call.1']
    #allocation6 [shape = 's32[1]{0}', space=sflag, size = 0x4, scoped, tag = 'scoped memory for tpu_custom_call.1']
    #allocation7 [shape = 'u8[16384]{0}', space=vmem, size = 0x4000, scoped, tag = 'input window, operand 2, single buffered']
    #allocation8 [shape = 's32[1]{0}', space=sflag, size = 0x4, scoped, tag = 'scoped memory for tpu_custom_call.1']
    #allocation9 [shape = 'u8[16384]{0}', space=vmem, size = 0x4000, scoped, tag = 'input window, operand 4, single buffered']
    #allocation10 [shape = 'u8[16384]{0}', space=vmem, size = 0x4000, scoped, tag = 'input window, operand 6, single buffered']
    #allocation11 [shape = 's32[1]{0}', space=sflag, size = 0x4, scoped, tag = 'scoped memory for tpu_custom_call.1']
    #allocation12 [shape = 'u8[512]{0}', space=vmem, size = 0x400, scoped, tag = 'output window, operand 0, single buffered']
    #allocation13 [shape = 'u8[512]{0}', space=vmem, size = 0x400, scoped, tag = 'output window, operand 1, single buffered']
    #allocation14 [shape = 's32[1]{0}', space=sflag, size = 0x4, scoped, tag = 'scoped memory for tpu_custom_call.1']
    %15 = vsyncpa [#allocation5], 0
    %16 = vsyncpa [#allocation8], 0
    %17 = vsyncpa [#allocation11], 0
    %18 = vsyncpa [#allocation6], 0
    %19 = vsyncpa [#allocation14], 0
    // Predicated region
    $region2: #{tpu_custom_call.1} parent=1 // pred_check
      _
    $region3: #{tpu_custom_call.1} parent=1 // pred_check_branch
      %21 = sbr.rel (0) target = $region5
    $region4: #{tpu_custom_call.1} parent=1 // pred_region
      %s23 = ssub.s32 16, 16
      %24 = vsyncadd [#allocation5], %s23
      %s26 = sshll.u32 [#allocation4], 4
      %s27 = int_to_ptr.vmem [resolvable:$true] %s26
      %29 = dma.hbm_to_vmem [thread:$0]  %s0, 16, %s27, [#allocation5]
    $region5: #{tpu_custom_call.1} parent=1 // pred_fallthru
      _
    // Predicated region
    $region6: #{tpu_custom_call.1} parent=1 // pred_check
      _
    $region7: #{tpu_custom_call.1} parent=1 // pred_check_branch
      %31 = sbr.rel (0) target = $region9
    $region8: #{tpu_custom_call.1} parent=1 // pred_region
      _
    $region9: #{tpu_custom_call.1} parent=1 // pred_fallthru
      _
    // Predicated region
    $region10: #{tpu_custom_call.1} parent=1 // pred_check
      _
    $region11: #{tpu_custom_call.1} parent=1 // pred_check_branch
      %33 = sbr.rel (0) target = $region13
    $region12: #{tpu_custom_call.1} parent=1 // pred_region
      %s35 = ssub.s32 512, 512
      %36 = vsyncadd [#allocation8], %s35
      %s37 = sshll.u32 [#allocation7], 4
      %s38 = int_to_ptr.vmem [resolvable:$true] %s37
      %43 = dma.hbm_to_vmem [thread:$0]  %s2, 512, %s38, [#allocation8], 128, 128, 8
    $region13: #{tpu_custom_call.1} parent=1 // pred_fallthru
      _
    // Predicated region
    $region14: #{tpu_custom_call.1} parent=1 // pred_check
      _
    $region15: #{tpu_custom_call.1} parent=1 // pred_check_branch
      %45 = sbr.rel (0) target = $region17
    $region16: #{tpu_custom_call.1} parent=1 // pred_region
      _
    $region17: #{tpu_custom_call.1} parent=1 // pred_fallthru
      _
    // Predicated region
    $region18: #{tpu_custom_call.1} parent=1 // pred_check
      _
    $region19: #{tpu_custom_call.1} parent=1 // pred_check_branch
      %47 = sbr.rel (0) target = $region21
    $region20: #{tpu_custom_call.1} parent=1 // pred_region
      %s49 = ssub.s32 512, 512
      %50 = vsyncadd [#allocation8], %s49
      %s51 = sshll.u32 [#allocation9], 4
      %s52 = int_to_ptr.vmem [resolvable:$true] %s51
      %57 = dma.hbm_to_vmem [thread:$0]  %s4, 512, %s52, [#allocation8], 128, 128, 8
    $region21: #{tpu_custom_call.1} parent=1 // pred_fallthru
      _
    // Predicated region
    $region22: #{tpu_custom_call.1} parent=1 // pred_check
      _
    $region23: #{tpu_custom_call.1} parent=1 // pred_check_branch
      %59 = sbr.rel (0) target = $region25
    $region24: #{tpu_custom_call.1} parent=1 // pred_region
      _
    $region25: #{tpu_custom_call.1} parent=1 // pred_fallthru
      _
    // Predicated region
    $region26: #{tpu_custom_call.1} parent=1 // pred_check
      _
    $region27: #{tpu_custom_call.1} parent=1 // pred_check_branch
      %61 = sbr.rel (0) target = $region29
    $region28: #{tpu_custom_call.1} parent=1 // pred_region
      %s63 = ssub.s32 512, 512
      %64 = vsyncadd [#allocation11], %s63
      %s65 = sshll.u32 [#allocation10], 4
      %s66 = int_to_ptr.vmem [resolvable:$true] %s65
      %71 = dma.hbm_to_vmem [thread:$0]  %s6, 512, %s66, [#allocation11], 128, 128, 8
    $region29: #{tpu_custom_call.1} parent=1 // pred_fallthru
      _
    // Predicated region
    $region30: #{tpu_custom_call.1} parent=1 // pred_check
      _
    $region31: #{tpu_custom_call.1} parent=1 // pred_check_branch
      %73 = sbr.rel (0) target = $region33
    $region32: #{tpu_custom_call.1} parent=1 // pred_region
      _
    $region33: #{tpu_custom_call.1} parent=1 // pred_fallthru
      _
    // Predicated region
    $region34: #{tpu_custom_call.1} parent=1 // pred_check
      _
    $region35: #{tpu_custom_call.1} parent=1 // pred_check_branch
      %75 = sbr.rel (0) target = $region37
    $region36: #{tpu_custom_call.1} parent=1 // pred_region
      %76 = dma.done [#allocation5], 16
    $region37: #{tpu_custom_call.1} parent=1 // pred_fallthru
      _
    // Predicated region
    $region38: #{tpu_custom_call.1} parent=1 // pred_check
      _
    $region39: #{tpu_custom_call.1} parent=1 // pred_check_branch
      %78 = sbr.rel (0) target = $region41
    $region40: #{tpu_custom_call.1} parent=1 // pred_region
      %79 = dma.done [#allocation8], 512
    $region41: #{tpu_custom_call.1} parent=1 // pred_fallthru
      _
    // Predicated region
    $region42: #{tpu_custom_call.1} parent=1 // pred_check
      _
    $region43: #{tpu_custom_call.1} parent=1 // pred_check_branch
      %81 = sbr.rel (0) target = $region45
    $region44: #{tpu_custom_call.1} parent=1 // pred_region
      %82 = dma.done [#allocation8], 512
    $region45: #{tpu_custom_call.1} parent=1 // pred_fallthru
      _
    // Predicated region
    $region46: #{tpu_custom_call.1} parent=1 // pred_check
      _
    $region47: #{tpu_custom_call.1} parent=1 // pred_check_branch
      %84 = sbr.rel (0) target = $region49
    $region48: #{tpu_custom_call.1} parent=1 // pred_region
      %85 = dma.done [#allocation11], 512
    $region49: #{tpu_custom_call.1} parent=1 // pred_fallthru
      _
    %v86 = vld [vmem:[#allocation4] sm:$0x1]
    %v87 = vmax.f32 %v86, 0.0
    %v88 = vld [vmem:[#allocation7] sm:$0xff]
    %v89 = vld [vmem:[#allocation7 + $0x8] sm:$0xff]
    %v90 = vld [vmem:[#allocation7 + $0x10] sm:$0xff]
    %v91 = vld [vmem:[#allocation7 + $0x18] sm:$0xff]
    %v92 = vld [vmem:[%s3] sm:$0x1]
    %vm93 = vcmask 261120
    %v95 = vsel %vm93, %v87, 0
    %97 = vmatprep.subr.mxu0 0.0
    %98 = vmatpush1.msra.mxu0 %v88
    %99 = vmatprep.subr.mxu0 0.0
    %100 = vmatpush1.msra.mxu0 %v89
    %101 = vmatprep.subr.mxu0 0.0
    %102 = vmatpush1.msra.mxu0 %v90
    %103 = vmatprep.subr.mxu0 0.0
    %104 = vmatpush1.msra.mxu0 %v91
    %105 = vmatprep.subr.mxu0 0.0
    %106 = vmatpush1.msra.mxu0 0.0
    %107 = vmatprep.subr.mxu0 0.0
    %108 = vmatpush1.msra.mxu0 0.0
    %109 = vmatprep.subr.mxu0 0.0
    %110 = vmatpush1.msra.mxu0 0.0
    %111 = vmatprep.subr.mxu0 0.0
    %112 = vmatpush1.msra.mxu0 0.0
    %113 = vmatprep.subr.mxu0 0.0
    %114 = vmatpush1.msra.mxu0 0.0
    %115 = vmatprep.subr.mxu0 0.0
    %116 = vmatpush1.msra.mxu0 0.0
    %117 = vmatprep.subr.mxu0 0.0
    %118 = vmatpush1.msra.mxu0 0.0
    %119 = vmatprep.subr.mxu0 0.0
    %120 = vmatpush1.msra.mxu0 0.0
    %121 = vmatprep.subr.mxu0 0.0
    %122 = vmatpush1.msra.mxu0 0.0
    %123 = vmatprep.subr.mxu0 0.0
    %124 = vmatpush1.msra.mxu0 0.0
    %125 = vmatprep.subr.mxu0 0.0
    %126 = vmatpush1.msra.mxu0 0.0
    %127 = vmatprep.subr.mxu0 0.0
    %128 = vmatpush1.msra.mxu0 0.0
    %129 = vmatprep.subr.mxu0 0.0
    %130 = vmatpush1.msra.mxu0 0.0
    %131 = vmatprep.subr.mxu0 0.0
    %132 = vmatpush1.msra.mxu0 0.0
    %133 = vmatprep.subr.mxu0 0.0
    %134 = vmatpush1.msra.mxu0 0.0
    %135 = vmatprep.subr.mxu0 0.0
    %136 = vmatpush1.msra.mxu0 0.0
    %137 = vmatprep.subr.mxu0 0.0
    %138 = vmatpush1.msra.mxu0 0.0
    %139 = vmatprep.subr.mxu0 0.0
    %140 = vmatpush1.msra.mxu0 0.0
    %141 = vmatprep.subr.mxu0 0.0
    %142 = vmatpush1.msra.mxu0 0.0
    %143 = vmatprep.subr.mxu0 0.0
    %144 = vmatpush1.msra.mxu0 0.0
    %145 = vmatprep.subr.mxu0 0.0
    %146 = vmatpush1.msra.mxu0 0.0
    %147 = vmatprep.subr.mxu0 0.0
    %148 = vmatpush1.msra.mxu0 0.0
    %149 = vmatprep.subr.mxu0 0.0
    %150 = vmatpush1.msra.mxu0 0.0
    %151 = vmatprep.subr.mxu0 0.0
    %152 = vmatpush1.msra.mxu0 0.0
    %153 = vmatprep.subr.mxu0 0.0
    %154 = vmatpush1.msra.mxu0 0.0
    %155 = vmatprep.subr.mxu0 0.0
    %156 = vmatpush1.msra.mxu0 0.0
    %157 = vmatprep.subr.mxu0 0.0
    %158 = vmatpush1.msra.mxu0 0.0
    %159 = vmatprep.subr.mxu0 0.0
    %160 = vmatpush1.msra.mxu0 0.0
    %161 = vmatprep.mubr.f32.mxu0 0.0
    %162 = vmatmul.mubr.f32.gmra.mrb[0].mxu0 %v95
    %v163 = vpop.f32.mrb[0].mxu0
    %v164 = vadd.f32 %v92, %v163
    %v165 = vpop.f32.mrb[0].mxu0
    %166 = vdwg.mxu0
    %vm167 = vcmask 778240
    %168 = vst.msk [vmem:[#allocation2] sm:$0x1] %vm167, %v164
    %v169 = vld [vmem:[%s1] sm:$0x1]
    %v170 = vld [vmem:[#allocation9] sm:$0xff]
    %v171 = vld [vmem:[#allocation9 + $0x8] sm:$0xff]
    %v172 = vld [vmem:[#allocation9 + $0x10] sm:$0xff]
    %v173 = vld [vmem:[#allocation9 + $0x18] sm:$0xff]
    %v174 = vld [vmem:[%s5] sm:$0x1]
    %v176 = vsel %vm93, %v169, 0
    %178 = vmatprep.subr.mxu0 0.0
    %179 = vmatpush1.msra.mxu0 %v170
    %180 = vmatprep.subr.mxu0 0.0
    %181 = vmatpush1.msra.mxu0 %v171
    %182 = vmatprep.subr.mxu0 0.0
    %183 = vmatpush1.msra.mxu0 %v172
    %184 = vmatprep.subr.mxu0 0.0
    %185 = vmatpush1.msra.mxu0 %v173
    %186 = vmatprep.subr.mxu0 0.0
    %187 = vmatpush1.msra.mxu0 0.0
    %188 = vmatprep.subr.mxu0 0.0
    %189 = vmatpush1.msra.mxu0 0.0
    %190 = vmatprep.subr.mxu0 0.0
    %191 = vmatpush1.msra.mxu0 0.0
    %192 = vmatprep.subr.mxu0 0.0
    %193 = vmatpush1.msra.mxu0 0.0
    %194 = vmatprep.subr.mxu0 0.0
    %195 = vmatpush1.msra.mxu0 0.0
    %196 = vmatprep.subr.mxu0 0.0
    %197 = vmatpush1.msra.mxu0 0.0
    %198 = vmatprep.subr.mxu0 0.0
    %199 = vmatpush1.msra.mxu0 0.0
    %200 = vmatprep.subr.mxu0 0.0
    %201 = vmatpush1.msra.mxu0 0.0
    %202 = vmatprep.subr.mxu0 0.0
    %203 = vmatpush1.msra.mxu0 0.0
    %204 = vmatprep.subr.mxu0 0.0
    %205 = vmatpush1.msra.mxu0 0.0
    %206 = vmatprep.subr.mxu0 0.0
    %207 = vmatpush1.msra.mxu0 0.0
    %208 = vmatprep.subr.mxu0 0.0
    %209 = vmatpush1.msra.mxu0 0.0
    %210 = vmatprep.subr.mxu0 0.0
    %211 = vmatpush1.msra.mxu0 0.0
    %212 = vmatprep.subr.mxu0 0.0
    %213 = vmatpush1.msra.mxu0 0.0
    %214 = vmatprep.subr.mxu0 0.0
    %215 = vmatpush1.msra.mxu0 0.0
    %216 = vmatprep.subr.mxu0 0.0
    %217 = vmatpush1.msra.mxu0 0.0
    %218 = vmatprep.subr.mxu0 0.0
    %219 = vmatpush1.msra.mxu0 0.0
    %220 = vmatprep.subr.mxu0 0.0
    %221 = vmatpush1.msra.mxu0 0.0
    %222 = vmatprep.subr.mxu0 0.0
    %223 = vmatpush1.msra.mxu0 0.0
    %224 = vmatprep.subr.mxu0 0.0
    %225 = vmatpush1.msra.mxu0 0.0
    %226 = vmatprep.subr.mxu0 0.0
    %227 = vmatpush1.msra.mxu0 0.0
    %228 = vmatprep.subr.mxu0 0.0
    %229 = vmatpush1.msra.mxu0 0.0
    %230 = vmatprep.subr.mxu0 0.0
    %231 = vmatpush1.msra.mxu0 0.0
    %232 = vmatprep.subr.mxu0 0.0
    %233 = vmatpush1.msra.mxu0 0.0
    %234 = vmatprep.subr.mxu0 0.0
    %235 = vmatpush1.msra.mxu0 0.0
    %236 = vmatprep.subr.mxu0 0.0
    %237 = vmatpush1.msra.mxu0 0.0
    %238 = vmatprep.subr.mxu0 0.0
    %239 = vmatpush1.msra.mxu0 0.0
    %240 = vmatprep.subr.mxu0 0.0
    %241 = vmatpush1.msra.mxu0 0.0
    %242 = vmatprep.mubr.f32.mxu0 0.0
    %243 = vmatmul.mubr.f32.gmra.mrb[0].mxu0 %v176
    %v244 = vpop.f32.mrb[0].mxu0
    %v245 = vadd.f32 %v174, %v244
    %v246 = vpop.f32.mrb[0].mxu0
    %247 = vdwg.mxu0
    %v248 = vld [vmem:[#allocation2] sm:$0x1]
    %v249 = vadd.f32 %v248, %v245
    %v250 = vxor.u32 %v249, 2147483648
    %v251 = vmul.f32 %v250, 1.442695
    %v252 = vpow.pop %v251
    %v253 = vadd.f32 %v252, 1.0
    %v254 = vrcp.pop %v253
    %v255 = vmul.f32 1.0, %v254
    %v258 = vunpack.c.l.s4 1966171168
    %v259 = vunpack.c.0.s8 %v258
    %v260 = vlaneseq
    %v261 = vshrl.u32 %v260, 7
    %v262 = vsub.s32 %v259, %v261
    %v263 = vrot.slane %v245, %v262
    %v265 = vunpack.c.l.s4 1966171168
    %v266 = vunpack.c.0.s8 %v265
    %v267 = vlaneseq
    %v268 = vshrl.u32 %v267, 7
    %v269 = vsub.s32 %v266, %v268
    %v270 = vrot.slane %v263, %v269
    %271 = vrot.lane.b32.xlu0 %v270, 64
    %v272 = vpop.permute.xlu0 %271
    %v274 = vmul.f32 %v255, %v272
    %276 = vrot.lane.b32.xlu0 %v274, 64
    %v277 = vpop.permute.xlu0 %276
    %v279 = vadd.f32 %v248, %v277
    %v280 = vtanh.pop %v279
    %v281 = vsub.f32 1.0, %v255
    %283 = vrot.lane.b32.xlu0 %v280, 96
    %v284 = vpop.permute.xlu0 %283
    %v286 = vmul.f32 %v281, %v284
    %287 = vrot.lane.b32.xlu0 %v169, 32
    %v288 = vpop.permute.xlu0 %287
    %v290 = vmul.f32 %v255, %v288
    %v291 = vadd.f32 %v286, %v290
    %v293 = vlaneseq
    %v294 = vshrl.u32 %v293, 7
    %v295 = vsub.s32 0, %v294
    %v296 = vrot.slane %v291, %v295
    %297 = vrot.lane.b32.xlu0 %v296, 96
    %v298 = vpop.permute.xlu0 %297
    %vm300 = vcmask 253952
    %301 = vst.msk [vmem:[#allocation3] sm:$0x1] %vm300, %v298
    %302 = vst.msk [vmem:[#allocation13] sm:$0x1] %vm300, %v298
    %v303 = vld [vmem:[#allocation3] sm:$0x1]
    %v304 = vld [vmem:[#allocation10] sm:$0xff]
    %v305 = vld [vmem:[#allocation10 + $0x8] sm:$0xff]
    %v306 = vld [vmem:[#allocation10 + $0x10] sm:$0xff]
    %v307 = vld [vmem:[#allocation10 + $0x18] sm:$0xff]
    %v308 = vld [vmem:[%s7] sm:$0x1]
    %v310 = vsel %vm93, %v303, 0
    %312 = vmatprep.subr.mxu0 0.0
    %313 = vmatpush1.msra.mxu0 %v304
    %314 = vmatprep.subr.mxu0 0.0
    %315 = vmatpush1.msra.mxu0 %v305
    %316 = vmatprep.subr.mxu0 0.0
    %317 = vmatpush1.msra.mxu0 %v306
    %318 = vmatprep.subr.mxu0 0.0
    %319 = vmatpush1.msra.mxu0 %v307
    %320 = vmatprep.subr.mxu0 0.0
    %321 = vmatpush1.msra.mxu0 0.0
    %322 = vmatprep.subr.mxu0 0.0
    %323 = vmatpush1.msra.mxu0 0.0
    %324 = vmatprep.subr.mxu0 0.0
    %325 = vmatpush1.msra.mxu0 0.0
    %326 = vmatprep.subr.mxu0 0.0
    %327 = vmatpush1.msra.mxu0 0.0
    %328 = vmatprep.subr.mxu0 0.0
    %329 = vmatpush1.msra.mxu0 0.0
    %330 = vmatprep.subr.mxu0 0.0
    %331 = vmatpush1.msra.mxu0 0.0
    %332 = vmatprep.subr.mxu0 0.0
    %333 = vmatpush1.msra.mxu0 0.0
    %334 = vmatprep.subr.mxu0 0.0
    %335 = vmatpush1.msra.mxu0 0.0
    %336 = vmatprep.subr.mxu0 0.0
    %337 = vmatpush1.msra.mxu0 0.0
    %338 = vmatprep.subr.mxu0 0.0
    %339 = vmatpush1.msra.mxu0 0.0
    %340 = vmatprep.subr.mxu0 0.0
    %341 = vmatpush1.msra.mxu0 0.0
    %342 = vmatprep.subr.mxu0 0.0
    %343 = vmatpush1.msra.mxu0 0.0
    %344 = vmatprep.subr.mxu0 0.0
    %345 = vmatpush1.msra.mxu0 0.0
    %346 = vmatprep.subr.mxu0 0.0
    %347 = vmatpush1.msra.mxu0 0.0
    %348 = vmatprep.subr.mxu0 0.0
    %349 = vmatpush1.msra.mxu0 0.0
    %350 = vmatprep.subr.mxu0 0.0
    %351 = vmatpush1.msra.mxu0 0.0
    %352 = vmatprep.subr.mxu0 0.0
    %353 = vmatpush1.msra.mxu0 0.0
    %354 = vmatprep.subr.mxu0 0.0
    %355 = vmatpush1.msra.mxu0 0.0
    %356 = vmatprep.subr.mxu0 0.0
    %357 = vmatpush1.msra.mxu0 0.0
    %358 = vmatprep.subr.mxu0 0.0
    %359 = vmatpush1.msra.mxu0 0.0
    %360 = vmatprep.subr.mxu0 0.0
    %361 = vmatpush1.msra.mxu0 0.0
    %362 = vmatprep.subr.mxu0 0.0
    %363 = vmatpush1.msra.mxu0 0.0
    %364 = vmatprep.subr.mxu0 0.0
    %365 = vmatpush1.msra.mxu0 0.0
    %366 = vmatprep.subr.mxu0 0.0
    %367 = vmatpush1.msra.mxu0 0.0
    %368 = vmatprep.subr.mxu0 0.0
    %369 = vmatpush1.msra.mxu0 0.0
    %370 = vmatprep.subr.mxu0 0.0
    %371 = vmatpush1.msra.mxu0 0.0
    %372 = vmatprep.subr.mxu0 0.0
    %373 = vmatpush1.msra.mxu0 0.0
    %374 = vmatprep.subr.mxu0 0.0
    %375 = vmatpush1.msra.mxu0 0.0
    %376 = vmatprep.mubr.f32.mxu0 0.0
    %377 = vmatmul.mubr.f32.gmra.mrb[0].mxu0 %v310
    %v378 = vpop.f32.mrb[0].mxu0
    %v379 = vadd.f32 %v308, %v378
    %v380 = vpop.f32.mrb[0].mxu0
    %381 = vdwg.mxu0
    %vm382 = vcmask 1040384
    %v383 = vsel %vm382, %v379, -inf
    %384 = vmax.xlane.f32.xlu0 %v383
    %v385 = vpop.xlane.xlu0 %384
    %v386 = vsub.f32 %v379, %v385
    %v387 = vmul.f32 %v386, 1.442695
    %v388 = vpow.pop %v387
    %v389 = vsel %vm382, %v388, 0.0
    %390 = vadd.xlane.f32.xlu0 %v389
    %v391 = vpop.xlane.xlu0 %390
    %v392 = vlog2.pop %v391
    %v393 = vmul.f32 %v392, 0.6931472
    %v394 = vsub.f32 %v386, %v393
    %395 = vst [vmem:[#allocation12] sm:$0x1] %v394
    // Predicated region
    $region50: #{tpu_custom_call.1} parent=1 // pred_check
      _
    $region51: #{tpu_custom_call.1} parent=1 // pred_check_branch
      %397 = sbr.rel (0) target = $region53
    $region52: #{tpu_custom_call.1} parent=1 // pred_region
      %s399 = ssub.s32 16, 16
      %400 = vsyncadd [#allocation6], %s399
      %s402 = sshll.u32 [#allocation12], 4
      %s403 = int_to_ptr.vmem [resolvable:$true] %s402
      %405 = dma.vmem_to_hbm [thread:$0]  %s403, 16, %s8, [#allocation6]
    $region53: #{tpu_custom_call.1} parent=1 // pred_fallthru
      _
    // Predicated region
    $region54: #{tpu_custom_call.1} parent=1 // pred_check
      _
    $region55: #{tpu_custom_call.1} parent=1 // pred_check_branch
      %407 = sbr.rel (0) target = $region57
    $region56: #{tpu_custom_call.1} parent=1 // pred_region
      %s409 = ssub.s32 16, 16
      %410 = vsyncadd [#allocation14], %s409
      %s412 = sshll.u32 [#allocation13], 4
      %s413 = int_to_ptr.vmem [resolvable:$true] %s412
      %415 = dma.vmem_to_hbm [thread:$0]  %s413, 16, %s9, [#allocation14]
    $region57: #{tpu_custom_call.1} parent=1 // pred_fallthru
      _
    // Predicated region
    $region58: #{tpu_custom_call.1} parent=1 // pred_check
      _
    $region59: #{tpu_custom_call.1} parent=1 // pred_check_branch
      %417 = sbr.rel (0) target = $region61
    $region60: #{tpu_custom_call.1} parent=1 // pred_region
      %418 = dma.done [#allocation6], 16
    $region61: #{tpu_custom_call.1} parent=1 // pred_fallthru
      _
    // Predicated region
    $region62: #{tpu_custom_call.1} parent=1 // pred_check
      _
    $region63: #{tpu_custom_call.1} parent=1 // pred_check_branch
      %420 = sbr.rel (0) target = $region65
    $region64: #{tpu_custom_call.1} parent=1 // pred_region
      %421 = dma.done [#allocation14], 16
    $region65: #{tpu_custom_call.1} parent=1 // pred_fallthru
      _
    %422 = vsyncpa [#allocation5], 1
    %423 = vsyncpa [#allocation8], 1
    %424 = vsyncpa [#allocation11], 1
    %425 = vsyncpa [#allocation6], 1
    %426 = vsyncpa [#allocation14], 1

</llo_original>
